<compile_context>
chip_gen: v6e
topology: v6e:2x2x1
jax: 0.10.0
libtpu: 0.0.40
codegen_flags: <defaults>
</compile_context>

<pallas_src>
import functools

import jax
import jax.numpy as jnp
from jax.experimental import pallas as pl
from jax.experimental.pallas import tpu as pltpu


def _focal_loss_kernel(logits_ref, targets_ref, alpha_ref, out_ref, acc_ref,
                       *, gamma: float, n: int, tile_n: int,
                       total_tiles: int, tiles_per_chunk: int):
    p = pl.program_id(0)   # chunk index ("parallel", per-TensorCore on v7x)
    i = pl.program_id(1)   # tile index within chunk ("arbitrary", reduction)

    @pl.when(i == 0)
    def _():
        acc_ref[...] = jnp.zeros_like(acc_ref)

    x = logits_ref[...].astype(jnp.float32)        # [tile_n, C]
    t = targets_ref[...]                           # [tile_n, 1] int32
    a = alpha_ref[...].astype(jnp.float32)         # [1, C]

    g = p * tiles_per_chunk + i                    # global (unclamped) tile id

    # Row-validity mask: padded rows of the ragged last tile, and entirely
    # padded trailing tiles of the last chunk, contribute exactly 0.
    row_in_tile = jax.lax.broadcasted_iota(jnp.int32, (tile_n, 1), 0)
    row_global = g * tile_n + row_in_tile
    valid = (row_global < n) & (g < total_tiles)   # [tile_n, 1] bool
    x = jnp.where(valid, x, 0.0)                   # keep padded rows finite

    # log-sum-exp over classes (lane axis); log_p = x[target] - lse is exact
    # and never hits log(0).
    m = jnp.max(x, axis=1, keepdims=True)                               # [tile_n, 1]
    lse = m + jnp.log(jnp.sum(jnp.exp(x - m), axis=1, keepdims=True))   # [tile_n, 1]

    # One-hot class mask (equivalent of class_mask.scatter_(1, ids, 1.0)).
    col = jax.lax.broadcasted_iota(jnp.int32, x.shape, 1)               # [tile_n, C]
    onehot = (col == t).astype(jnp.float32)

    x_t = jnp.sum(x * onehot, axis=1, keepdims=True)       # logits at target class
    log_p = x_t - lse                                      # log softmax[target]
    probs = jnp.exp(log_p)                                 # softmax[target]
    alpha_t = jnp.sum(a * onehot, axis=1, keepdims=True)   # alpha[target]

    one_m_p = 1.0 - probs
    # Specialize the focal modulation at trace time (gamma is a Python float).
    if float(gamma) == 2.0:
        focal = one_m_p * one_m_p
    elif float(gamma) == 1.0:
        focal = one_m_p
    elif float(gamma) == 0.0:
        focal = jnp.ones_like(one_m_p)
    elif float(gamma) == int(gamma) and gamma > 0:
        focal = one_m_p
        for _ in range(int(gamma) - 1):
            focal = focal * one_m_p
    else:
        focal = jnp.power(one_m_p, jnp.float32(gamma))

    loss = jnp.where(valid, -alpha_t * focal * log_p, 0.0)   # [tile_n, 1]
    acc_ref[...] += jnp.sum(loss, keepdims=True)             # (1, 1) running sum

    @pl.when(i == pl.num_programs(1) - 1)
    def _():
        # Lane-dense (8,128) store: chunk partial sum at [0, 0], zeros
        # elsewhere, so the wrapper can simply jnp.sum() the whole output.
        r = jax.lax.broadcasted_iota(jnp.int32, (8, 128), 0)
        c = jax.lax.broadcasted_iota(jnp.int32, (8, 128), 1)
        out_ref[...] = jnp.where((r == 0) & (c == 0), acc_ref[...], 0.0)


def _choose_tile_n(n: int, c: int, itemsize: int) -> int:
    # ~2 MiB logits tile target; with double buffering (2 bufs x (logits tile
    # + lane-padded targets tile)) this stays well under v5e's 16 MiB default
    # scoped VMEM and far under v7x's 64 MiB physical VMEM.  Cap rows at 2048
    # so the (tile_n, 1) int32 targets block (lane-padded to 128) is <= 1 MiB.
    target_bytes = 2 * 1024 * 1024
    rows = target_bytes // max(1, c * itemsize)
    rows = int(max(8, min(rows, 2048)))
    rows -= rows % 8
    return n if rows >= n else rows


def focal_loss(logits, targets, alpha, *, gamma=2.0, size_average=True,
               tile_n=None):
    """logits: [N, C] (any float dtype), targets: [N] int, alpha: [C] or [C, 1]."""
    N, C = logits.shape
    targets2d = targets.reshape(N, 1).astype(jnp.int32)
    alpha_row = jnp.reshape(alpha, (1, C)).astype(jnp.float32)

    if tile_n is None:
        tile_n = _choose_tile_n(N, C, logits.dtype.itemsize)
    tile_n = min(int(tile_n), N)
    if tile_n < N and tile_n % 8 != 0:          # partial blocks must be 8-row aligned
        tile_n = max(8, tile_n - tile_n % 8)

    total_tiles = (N + tile_n - 1) // tile_n
    num_chunks = 2 if total_tiles >= 2 else 1   # v7x: one chunk per TensorCore
    tiles_per_chunk = (total_tiles + num_chunks - 1) // num_chunks

    kernel = functools.partial(
        _focal_loss_kernel, gamma=float(gamma), n=N, tile_n=tile_n,
        total_tiles=total_tiles, tiles_per_chunk=tiles_per_chunk)

    def _tile_map(p, i):
        # Clamp so the DMA of padded trailing tiles stays in bounds; those
        # tiles are zeroed out inside the kernel via the validity mask.
        return (jnp.minimum(p * tiles_per_chunk + i, total_tiles - 1), 0)

    partials = pl.pallas_call(
        kernel,
        out_shape=jax.ShapeDtypeStruct((num_chunks * 8, 128), jnp.float32),
        grid=(num_chunks, tiles_per_chunk),
        in_specs=[
            pl.BlockSpec((tile_n, C), _tile_map),        # logits (native dtype)
            pl.BlockSpec((tile_n, 1), _tile_map),        # targets
            pl.BlockSpec((1, C), lambda p, i: (0, 0)),   # alpha, resident
        ],
        out_specs=pl.BlockSpec((8, 128), lambda p, i: (p, 0)),
        scratch_shapes=[pltpu.VMEM((1, 1), jnp.float32)],
        compiler_params=pltpu.CompilerParams(
            dimension_semantics=("parallel", "arbitrary")),
    )(logits, targets2d, alpha_row)

    total = jnp.sum(partials)   # only the [p*8, 0] entries are nonzero
    if size_average:
        total = total / jnp.float32(N)
    return total


def _focal_loss_ref(logits, targets, alpha, gamma=2.0, size_average=True):
    # Pure-JAX reference mirroring the PyTorch module.
    p = jax.nn.softmax(logits.astype(jnp.float32), axis=1)
    probs = jnp.take_along_axis(p, targets[:, None].astype(jnp.int32), axis=1)
    alpha_t = jnp.reshape(alpha, (-1,))[targets][:, None]
    batch_loss = -alpha_t * (1.0 - probs) ** gamma * jnp.log(probs)
    return jnp.mean(batch_loss) if size_average else jnp.sum(batch_loss)


if __name__ == "__main__":
    key = jax.random.PRNGKey(0)
    k1, k2, k3, k4 = jax.random.split(key, 4)

    # Case 1: mirrors the module defaults (alpha=None -> ones(num_classes, 1)).
    num_classes, N = 4, 8
    logits = jax.random.normal(k1, (N, num_classes), dtype=jnp.float32)
    targets = jax.random.randint(k2, (N,), 0, num_classes, dtype=jnp.int32)
    alpha = jnp.ones((num_classes, 1), dtype=jnp.float32)

    loss = focal_loss(logits, targets, alpha, gamma=2.0, size_average=True)
    loss = jax.block_until_ready(loss)
    ref = _focal_loss_ref(logits, targets, alpha, gamma=2.0, size_average=True)
    assert jnp.allclose(loss, ref, rtol=1e-5, atol=1e-5), (loss, ref)

    # Case 2: exercises N-tiling, the 2-chunk "parallel" split, the ragged /
    # clamped trailing tiles, non-uniform alpha, and size_average=False.
    N2, C2 = 300, 16
    logits2 = jax.random.normal(k3, (N2, C2), dtype=jnp.float32)
    targets2 = jax.random.randint(k4, (N2,), 0, C2, dtype=jnp.int32)
    alpha2 = jnp.linspace(0.25, 1.0, C2, dtype=jnp.float32)

    loss2 = focal_loss(logits2, targets2, alpha2, gamma=2.0,
                       size_average=False, tile_n=64)
    loss2 = jax.block_until_ready(loss2)
    ref2 = _focal_loss_ref(logits2, targets2, alpha2, gamma=2.0,
                           size_average=False)
    assert jnp.allclose(loss2, ref2, rtol=1e-4, atol=1e-4), (loss2, ref2)

    print("KERNEL_OK")
</pallas_src>

<mosaic_0001>
module attributes {stable_mosaic.version = 11 : i64} {
  func.func @_focal_loss_kernel(%arg0: i32, %arg1: i32, %arg2: memref<8x4xf32, #tpu.memory_space<vmem>>, %arg3: memref<8x1xi32, #tpu.memory_space<vmem>>, %arg4: memref<1x4xf32, #tpu.memory_space<vmem>>, %arg5: memref<8x128xf32, #tpu.memory_space<vmem>>, %arg6: memref<1x1xf32, #tpu.memory_space<vmem>>) attributes {dimension_semantics = [#tpu.dimension_semantics<parallel>, #tpu.dimension_semantics<arbitrary>], iteration_bounds = array<i64: 1, 1>, scalar_prefetch = 0 : i64, scratch_operands = 1 : i64, tpu.core_type = #tpu.core_type<tc>, window_params = [{transform_indices = @transform_0, window_bounds = array<i64: 8, 4>}, {transform_indices = @transform_1, window_bounds = array<i64: 8, 1>}, {pipeline_mode = #tpu.pipeline_mode<synchronous>, transform_indices = @transform_2, window_bounds = array<i64: 1, 4>}, {transform_indices = @transform_3, window_bounds = array<i64: 8, 128>}]} {
    %c0_i32 = arith.constant 0 : i32
    %0 = arith.cmpi eq, %arg1, %c0_i32 : i32
    %1 = arith.extui %0 : i1 to i32
    %c0_i32_0 = arith.constant 0 : i32
    %2 = arith.cmpi ne, %1, %c0_i32_0 : i32
    scf.if %2 {
      %cst_22 = arith.constant 0.000000e+00 : f32
      %64 = vector.broadcast %cst_22 : f32 to vector<1x1xf32>
      %c0_23 = arith.constant 0 : index
      %c0_24 = arith.constant 0 : index
      %65 = vector.load %arg6[%c0_23, %c0_24] : memref<1x1xf32, #tpu.memory_space<vmem>>, vector<1x1xf32>
      tpu.vector_store %arg6[%c0_23, %c0_24], %64 {strides = array<i32>} : memref<1x1xf32, #tpu.memory_space<vmem>>, vector<1x1xf32>,
    } else {
    }
    %c0 = arith.constant 0 : index
    %c0_1 = arith.constant 0 : index
    %3 = vector.load %arg2[%c0, %c0_1] : memref<8x4xf32, #tpu.memory_space<vmem>>, vector<8x4xf32>
    %c0_2 = arith.constant 0 : index
    %c0_3 = arith.constant 0 : index
    %4 = vector.load %arg3[%c0_2, %c0_3] : memref<8x1xi32, #tpu.memory_space<vmem>>, vector<8x1xi32>
    %c0_4 = arith.constant 0 : index
    %c0_5 = arith.constant 0 : index
    %5 = vector.load %arg4[%c0_4, %c0_5] : memref<1x4xf32, #tpu.memory_space<vmem>>, vector<1x4xf32>
    %c1_i32 = arith.constant 1 : i32
    %6 = arith.muli %arg0, %c1_i32 : i32
    %7 = arith.addi %6, %arg1 : i32
    %8 = tpu.iota {dimensions = array<i32: 0>} : vector<8x1xi32>
    %c8_i32 = arith.constant 8 : i32
    %9 = arith.muli %7, %c8_i32 : i32
    %10 = vector.broadcast %9 : i32 to vector<8x1xi32>
    %11 = arith.addi %10, %8 : vector<8x1xi32>
    %c8_i32_6 = arith.constant 8 : i32
    %12 = vector.broadcast %c8_i32_6 : i32 to vector<8x1xi32>
    %13 = arith.cmpi slt, %11, %12 : vector<8x1xi32>
    %c1_i32_7 = arith.constant 1 : i32
    %14 = arith.cmpi slt, %7, %c1_i32_7 : i32
    %15 = vector.broadcast %14 : i1 to vector<8x1xi1>
    %16 = arith.andi %13, %15 : vector<8x1xi1>
    %cst = arith.constant 0.000000e+00 : f32
    %17 = vector.shape_cast %16 : vector<8x1xi1> to vector<8x1xi1>
    %18 = vector.broadcast %17 : vector<8x1xi1> to vector<8x4xi1>
    %19 = vector.broadcast %cst : f32 to vector<8x4xf32>
    %20 = arith.select %18, %3, %19 : vector<8x4xi1>, vector<8x4xf32>
    %cst_8 = arith.constant dense<0xFF800000> : vector<8xf32>
    %21 = vector.multi_reduction <maximumf>, %20, %cst_8 [1] : vector<8x4xf32> to vector<8xf32>
    %22 = vector.shape_cast %21 : vector<8xf32> to vector<8x1xf32>
    %23 = vector.broadcast %22 : vector<8x1xf32> to vector<8x4xf32>
    %24 = arith.subf %20, %23 : vector<8x4xf32>
    %25 = math.exp %24 : vector<8x4xf32>
    %cst_9 = arith.constant dense<0.000000e+00> : vector<8xf32>
    %26 = vector.multi_reduction <add>, %25, %cst_9 [1] : vector<8x4xf32> to vector<8xf32>
    %27 = vector.shape_cast %26 : vector<8xf32> to vector<8x1xf32>
    %28 = math.log %27 : vector<8x1xf32>
    %29 = arith.addf %22, %28 : vector<8x1xf32>
    %30 = tpu.iota {dimensions = array<i32: 1>} : vector<8x4xi32>
    %31 = vector.broadcast %4 : vector<8x1xi32> to vector<8x4xi32>
    %32 = arith.cmpi eq, %30, %31 : vector<8x4xi32>
    %33 = arith.extui %32 : vector<8x4xi1> to vector<8x4xi32>
    %34 = arith.sitofp %33 : vector<8x4xi32> to vector<8x4xf32>
    %35 = arith.mulf %20, %34 : vector<8x4xf32>
    %cst_10 = arith.constant dense<0.000000e+00> : vector<8xf32>
    %36 = vector.multi_reduction <add>, %35, %cst_10 [1] : vector<8x4xf32> to vector<8xf32>
    %37 = vector.shape_cast %36 : vector<8xf32> to vector<8x1xf32>
    %38 = arith.subf %37, %29 : vector<8x1xf32>
    %39 = math.exp %38 : vector<8x1xf32>
    %40 = vector.broadcast %5 : vector<1x4xf32> to vector<8x4xf32>
    %41 = arith.mulf %40, %34 : vector<8x4xf32>
    %cst_11 = arith.constant dense<0.000000e+00> : vector<8xf32>
    %42 = vector.multi_reduction <add>, %41, %cst_11 [1] : vector<8x4xf32> to vector<8xf32>
    %43 = vector.shape_cast %42 : vector<8xf32> to vector<8x1xf32>
    %cst_12 = arith.constant 1.000000e+00 : f32
    %44 = vector.broadcast %cst_12 : f32 to vector<8x1xf32>
    %45 = arith.subf %44, %39 : vector<8x1xf32>
    %46 = arith.mulf %45, %45 : vector<8x1xf32>
    %cst_13 = arith.constant 0.000000e+00 : f32
    %47 = vector.broadcast %cst_13 : f32 to vector<8x1xf32>
    %48 = arith.subf %47, %43 : vector<8x1xf32>
    %49 = arith.mulf %48, %46 : vector<8x1xf32>
    %50 = arith.mulf %49, %38 : vector<8x1xf32>
    %cst_14 = arith.constant 0.000000e+00 : f32
    %51 = vector.broadcast %cst_14 : f32 to vector<8x1xf32>
    %52 = arith.select %16, %50, %51 : vector<8x1xi1>, vector<8x1xf32>
    %c0_15 = arith.constant 0 : index
    %c0_16 = arith.constant 0 : index
    %53 = vector.load %arg6[%c0_15, %c0_16] : memref<1x1xf32, #tpu.memory_space<vmem>>, vector<1x1xf32>
    %54 = vector.shape_cast %52 : vector<8x1xf32> to vector<1x8x1xf32>
    %cst_17 = arith.constant dense<0.000000e+00> : vector<1xf32>
    %55 = vector.multi_reduction <add>, %54, %cst_17 [1, 2] : vector<1x8x1xf32> to vector<1xf32>
    %56 = vector.shape_cast %55 : vector<1xf32> to vector<1x1x1xf32>
    %57 = vector.extract %56[0, 0, 0] : f32 from vector<1x1x1xf32>
    %58 = vector.broadcast %57 : f32 to vector<1x1xf32>
    %59 = arith.addf %53, %58 : vector<1x1xf32>
    %c0_18 = arith.constant 0 : index
    %c0_19 = arith.constant 0 : index
    %60 = vector.load %arg6[%c0_18, %c0_19] : memref<1x1xf32, #tpu.memory_space<vmem>>, vector<1x1xf32>
    tpu.vector_store %arg6[%c0_18, %c0_19], %59 {strides = array<i32>} : memref<1x1xf32, #tpu.memory_space<vmem>>, vector<1x1xf32>,
    %c0_i32_20 = arith.constant 0 : i32
    %61 = arith.cmpi eq, %arg1, %c0_i32_20 : i32
    %62 = arith.extui %61 : i1 to i32
    %c0_i32_21 = arith.constant 0 : i32
    %63 = arith.cmpi ne, %62, %c0_i32_21 : i32
    scf.if %63 {
      %64 = tpu.iota {dimensions = array<i32: 0>} : vector<8x128xi32>
      %65 = tpu.iota {dimensions = array<i32: 1>} : vector<8x128xi32>
      %c0_i32_22 = arith.constant 0 : i32
      %66 = vector.broadcast %c0_i32_22 : i32 to vector<8x128xi32>
      %67 = arith.cmpi eq, %64, %66 : vector<8x128xi32>
      %c0_i32_23 = arith.constant 0 : i32
      %68 = vector.broadcast %c0_i32_23 : i32 to vector<8x128xi32>
      %69 = arith.cmpi eq, %65, %68 : vector<8x128xi32>
      %70 = arith.andi %67, %69 : vector<8x128xi1>
      %c0_24 = arith.constant 0 : index
      %c0_25 = arith.constant 0 : index
      %71 = vector.load %arg6[%c0_24, %c0_25] : memref<1x1xf32, #tpu.memory_space<vmem>>, vector<1x1xf32>
      %cst_26 = arith.constant 0.000000e+00 : f32
      %72 = vector.shape_cast %71 : vector<1x1xf32> to vector<1x1xf32>
      %73 = vector.broadcast %72 : vector<1x1xf32> to vector<8x128xf32>
      %74 = vector.broadcast %cst_26 : f32 to vector<8x128xf32>
      %75 = arith.select %70, %73, %74 : vector<8x128xi1>, vector<8x128xf32>
      %c0_27 = arith.constant 0 : index
      %c0_28 = arith.constant 0 : index
      %76 = vector.load %arg5[%c0_27, %c0_28] : memref<8x128xf32, #tpu.memory_space<vmem>>, vector<8x128xf32>
      tpu.vector_store %arg5[%c0_27, %c0_28], %75 {strides = array<i32>} : memref<8x128xf32, #tpu.memory_space<vmem>>, vector<8x128xf32>,
    } else {
    }
    return
  }
  func.func @transform_0(%arg0: i32, %arg1: i32) -> (i32, i32) {
    %c1_i32 = arith.constant 1 : i32
    %0 = arith.muli %arg0, %c1_i32 : i32
    %1 = arith.addi %0, %arg1 : i32
    %c0_i32 = arith.constant 0 : i32
    %2 = arith.minsi %1, %c0_i32 : i32
    %c0_i32_0 = arith.constant 0 : i32
    %c0_i32_1 = arith.constant 0 : i32
    return %2, %c0_i32_0 : i32, i32
  }
  func.func @transform_1(%arg0: i32, %arg1: i32) -> (i32, i32) {
    %c1_i32 = arith.constant 1 : i32
    %0 = arith.muli %arg0, %c1_i32 : i32
    %1 = arith.addi %0, %arg1 : i32
    %c0_i32 = arith.constant 0 : i32
    %2 = arith.minsi %1, %c0_i32 : i32
    %c0_i32_0 = arith.constant 0 : i32
    %c0_i32_1 = arith.constant 0 : i32
    return %2, %c0_i32_0 : i32, i32
  }
  func.func @transform_2(%arg0: i32, %arg1: i32) -> (i32, i32) {
    %c0_i32 = arith.constant 0 : i32
    %c0_i32_0 = arith.constant 0 : i32
    %c0_i32_1 = arith.constant 0 : i32
    return %c0_i32, %c0_i32_0 : i32, i32
  }
  func.func @transform_3(%arg0: i32, %arg1: i32) -> (i32, i32) {
    %c0_i32 = arith.constant 0 : i32
    %c0_i32_0 = arith.constant 0 : i32
    return %arg0, %c0_i32 : i32, i32
  }
}

</mosaic_0001>

<llo_original>
// kernel: tpu_custom_call.1
$region0: #{tpu_custom_call.1}
  #allocation0 [shape = 'u32[]', space=smem, size = 0x4, offset = 0x4, fixed_abs, tag = 'smem constant byte address 0x4 - core index']
  #allocation1 [shape = 'u32[144,128]{1,0:T(1,128)}', space=vmem, size = 0x12000, scoped, tag = 'internal scratch']
  #allocation2 [shape = 'f32[1,1]{1,0:T(1,128)}', space=vmem, size = 0x200, scoped, tag = 'scratch operand']
  %s0 = inlined_call_operand.vmem [shape: f32[8,4], index: 0, kind: input, shape index: {}]
  %s1 = inlined_call_operand.vmem [shape: s32[8,1], index: 1, kind: input, shape index: {}]
  %s2 = inlined_call_operand.vmem [shape: f32[1,4], index: 2, kind: input, shape index: {}]
  %s3 = inlined_call_operand.hbm [shape: f32[8,128], index: 3, kind: output, shape index: {}]
  %s4 = sld [smem:[#allocation0]]
  $region30: #{tpu_custom_call.1} parent=0
    _
  %s6 = ssub.s32 1, %s4
  %s7 = scalar_select 0, %s6, %s4
  $region1: #{tpu_custom_call.1} parent=0
    #allocation3 [shape = 'u8[4096]{0}', space=vmem, size = 0x1000, scoped, tag = 'output window, operand 0, single buffered']
    #allocation4 [shape = 's32[1]{0}', space=sflag, size = 0x4, scoped, tag = 'scoped memory for tpu_custom_call.1']
    %8 = vsyncpa [#allocation4], 0
    // Predicated region
    $region2: #{tpu_custom_call.1} parent=1 // pred_check
      _
    $region3: #{tpu_custom_call.1} parent=1 // pred_check_branch
      %10 = sbr.rel (0) target = $region5
    $region4: #{tpu_custom_call.1} parent=1 // pred_region
      %s11 = sadd.s32 0, 0
      %p12 = scmp.lt.s32.totalorder %s11, 0
      %s13 = scalar_select %p12, %s11, 0
      %p14 = scmp.lt.s32.totalorder %s13, 0
      %s15 = scalar_select %p14, %s13, 0
      %s16 = smul.addr %s15, 8
      %s17 = scalar_lea.vmem %s0, %s16
      %s18 = sadd.s32 0, 0
      %p19 = scmp.lt.s32.totalorder %s18, 0
      %s20 = scalar_select %p19, %s18, 0
    $region5: #{tpu_custom_call.1} parent=1 // pred_fallthru
      _
    // Predicated region
    $region6: #{tpu_custom_call.1} parent=1 // pred_check
      _
    $region7: #{tpu_custom_call.1} parent=1 // pred_check_branch
      %22 = sbr.rel (0) target = $region9
    $region8: #{tpu_custom_call.1} parent=1 // pred_region
      %s23 = sadd.s32 0, 0
      %p24 = scmp.lt.s32.totalorder %s23, 0
      %s25 = scalar_select %p24, %s23, 0
      %p26 = scmp.lt.s32.totalorder %s25, 0
      %s27 = scalar_select %p26, %s25, 0
      %s28 = smul.addr %s27, 8
      %s29 = scalar_lea.vmem %s1, %s28
      %s30 = sadd.s32 0, 0
      %p31 = scmp.lt.s32.totalorder %s30, 0
      %s32 = scalar_select %p31, %s30, 0
    $region9: #{tpu_custom_call.1} parent=1 // pred_fallthru
      _
    // Predicated region
    $region10: #{tpu_custom_call.1} parent=1 // pred_check
      _
    $region11: #{tpu_custom_call.1} parent=1 // pred_check_branch
      %34 = sbr.rel (0) target = $region13
    $region12: #{tpu_custom_call.1} parent=1 // pred_region
      _
    $region13: #{tpu_custom_call.1} parent=1 // pred_fallthru
      _
    %s35 = sadd.s32 0, 0
    %p36 = scmp.lt.s32.totalorder %s35, 0
    %s37 = scalar_select %p36, %s35, 0
    %p38 = scmp.lt.s32.totalorder %s37, 0
    %s39 = scalar_select %p38, %s37, 0
    %s40 = smul.addr %s39, 8
    %s41 = scalar_lea.vmem %s0, %s40
    %s42 = sadd.s32 0, 0
    %p43 = scmp.lt.s32.totalorder %s42, 0
    %s44 = scalar_select %p43, %s42, 0
    %p45 = scmp.lt.s32.totalorder %s44, 0
    %s46 = scalar_select %p45, %s44, 0
    %s47 = smul.addr %s46, 8
    %s48 = scalar_lea.vmem %s1, %s47
    %s49 = sadd.s32 0, 0
    %p50 = scmp.lt.s32.totalorder %s49, 0
    %s51 = scalar_select %p50, %s49, 0
    %p52 = scmp.lt.s32.totalorder %s51, 0
    %s53 = scalar_select %p52, %s51, 0
    %s54 = smul.addr %s53, 8
    %s55 = scalar_lea.vmem %s0, %s54
    %s56 = sadd.s32 0, 0
    %p57 = scmp.lt.s32.totalorder %s56, 0
    %s58 = scalar_select %p57, %s56, 0
    %s59 = sadd.s32 0, 0
    %p60 = scmp.lt.s32.totalorder %s59, 0
    %s61 = scalar_select %p60, %s59, 0
    %p62 = scmp.lt.s32.totalorder %s61, 0
    %s63 = scalar_select %p62, %s61, 0
    %s64 = smul.addr %s63, 8
    %s65 = scalar_lea.vmem %s1, %s64
    %s66 = sadd.s32 0, 0
    %p67 = scmp.lt.s32.totalorder %s66, 0
    %s68 = scalar_select %p67, %s66, 0
    %p69 = scmp.eq.s32.totalorder 0, 0
    // Predicated region
    $region14: #{tpu_custom_call.1} parent=1 // pred_check
      %p70 = pneg %p69
    $region15: #{tpu_custom_call.1} parent=1 // pred_check_branch
      %72 = sbr.rel (%p70) target = $region17
    $region16: #{tpu_custom_call.1} parent=1 // pred_region
      %vm73 = vcmask 0
      %74 = vst.msk [vmem:[#allocation2] sm:$0x1] %vm73, 0.0
    $region17: #{tpu_custom_call.1} parent=1 // pred_fallthru
      _
    %v75 = vld [vmem:[%s55] sm:$0xff]
    %v76 = vld [vmem:[%s65] sm:$0xff]
    %v77 = vld [vmem:[%s2] sm:$0x1]
    %s78 = sadd.s32 0, 0
    %v79 = vlaneseq
    %v80 = vshrl.u32 %v79, 7
    %s81 = smul.u32 %s78, 8
    %v82 = vstv %s81
    %v83 = vadd.s32 %v82, %v80
    %vm84 = vcmp.lt.s32.totalorder %v83, 8
    %p85 = scmp.lt.s32.totalorder %s78, 1
    %s86 = scalar_select %p85, 1, 0
    %v87 = vstv %s86
    %vm88 = vcmp.eq.s32.totalorder %v87, 1
    %vm89 = vmand %vm84, %vm88
    %v90 = vsel %vm89, 1, 0
    %vm91 = vcmp.eq.s32.totalorder %v90, 1
    %v92 = vsel %vm91, %v75, 0.0
    %vm93 = vcmask 31744
    %v94 = vsel %vm93, %v92, -inf
    %95 = vmax.xlane.f32.xlu0 %v94
    %v96 = vpop.xlane.xlu0 %95
    %v97 = vsub.f32 %v92, %v96
    %v98 = vmul.f32 %v97, 1.442695
    %v99 = vpow.pop %v98
    %v100 = vsel %vm93, %v99, 0.0
    %101 = vadd.xlane.f32.xlu0 %v100
    %v102 = vpop.xlane.xlu0 %101
    %v103 = vlog2.pop %v102
    %v104 = vmul.f32 %v103, 0.6931472
    %v105 = vadd.f32 %v96, %v104
    %v106 = vlaneseq
    %v107 = vand.u32 %v106, 127
    %108 = vset.pattern.permute.xlu0 0
    %109 = vperm.xlu0 %108, %v76
    %v110 = vpop.permute.xlu0 %109
    %vm111 = vcmp.eq.s32.totalorder %v107, %v110
    %v112 = vsel %vm111, 1, 0
    %v113 = vcvt.s32.f32 %v112
    %v114 = vmul.f32 %v92, %v113
    %v115 = vsel %vm93, %v114, 0.0
    %116 = vadd.xlane.f32.xlu0 %v115
    %v117 = vpop.xlane.xlu0 %116
    %v118 = vsub.f32 %v117, %v105
    %v119 = vmul.f32 %v118, 1.442695
    %v120 = vpow.pop %v119
    %v122 = vlaneseq
    %v123 = vshrl.u32 %v122, 7
    %v124 = vsub.s32 0, %v123
    %v125 = vrot.slane %v77, %v124
    %v127 = vmul.f32 %v125, %v113
    %v128 = vsel %vm93, %v127, 0.0
    %129 = vadd.xlane.f32.xlu0 %v128
    %v130 = vpop.xlane.xlu0 %129
    %v131 = vsub.f32 1.0, %v120
    %v132 = vmul.f32 %v131, %v131
    %v133 = vsub.f32 0.0, %v130
    %v134 = vmul.f32 %v133, %v132
    %v135 = vmul.f32 %v134, %v118
    %v136 = vsel %vm89, %v135, 0.0
    %v137 = vld [vmem:[#allocation2] sm:$0x1]
    %vm138 = vcmask 7168
    %v139 = vsel %vm138, %v136, 0.0
    %140 = vadd.xlane.f32.xlu0 %v139
    %v141 = vpop.xlane.xlu0 %140
    %v142 = vrot.slane %v141, 4
    %v143 = vadd.f32 %v141, %v142
    %v144 = vrot.slane %v143, 2
    %v145 = vadd.f32 %v143, %v144
    %v146 = vrot.slane %v145, 1
    %v147 = vadd.f32 %v145, %v146
    %s148 = vtos %v147
    %v149 = vstv %s148
    %v150 = vadd.f32 %v137, %v149
    %vm151 = vcmask 0
    %152 = vst.msk [vmem:[#allocation2] sm:$0x1] %vm151, %v150
    // Predicated region
    $region18: #{tpu_custom_call.1} parent=1 // pred_check
      %p153 = pneg %p69
    $region19: #{tpu_custom_call.1} parent=1 // pred_check_branch
      %155 = sbr.rel (%p153) target = $region21
    $region20: #{tpu_custom_call.1} parent=1 // pred_region
      %vm156 = vcmp.eq.s32.totalorder %v80, 0
      %vm157 = vcmp.eq.s32.totalorder %v107, 0
      %vm158 = vmand %vm156, %vm157
      %v159 = vld [vmem:[#allocation2] sm:$0x1]
      %v161 = vlaneseq
      %v162 = vshrl.u32 %v161, 7
      %v163 = vsub.s32 0, %v162
      %v164 = vrot.slane %v159, %v163
      %165 = vset.pattern.permute.xlu0 0
      %166 = vperm.xlu0 %165, %v164
      %v167 = vpop.permute.xlu0 %166
      %v169 = vsel %vm158, %v167, 0.0
      %170 = vst [vmem:[#allocation3] sm:$0xff] %v169
    $region21: #{tpu_custom_call.1} parent=1 // pred_fallthru
      _
    // Predicated region
    $region22: #{tpu_custom_call.1} parent=1 // pred_check
      _
    $region23: #{tpu_custom_call.1} parent=1 // pred_check_branch
      %172 = sbr.rel (0) target = $region25
    $region24: #{tpu_custom_call.1} parent=1 // pred_region
      %s174 = ssub.s32 128, 128
      %175 = vsyncadd [#allocation4], %s174
      %s177 = sshll.u32 [#allocation3], 4
      %s178 = int_to_ptr.vmem [resolvable:$true] %s177
      %180 = dma.vmem_to_hbm [thread:$0]  %s178, 128, %s3, [#allocation4]
    $region25: #{tpu_custom_call.1} parent=1 // pred_fallthru
      _
    // Predicated region
    $region26: #{tpu_custom_call.1} parent=1 // pred_check
      _
    $region27: #{tpu_custom_call.1} parent=1 // pred_check_branch
      %182 = sbr.rel (0) target = $region29
    $region28: #{tpu_custom_call.1} parent=1 // pred_region
      %183 = dma.done [#allocation4], 128
    $region29: #{tpu_custom_call.1} parent=1 // pred_fallthru
      _
    %184 = vsyncpa [#allocation4], 1

</llo_original>
